<compile_context>
chip_gen: v5e
topology: v5e:2x2
jax: 0.10.0
libtpu: 0.0.40
codegen_flags: <defaults>
</compile_context>

<pallas_src>
import jax
import jax.numpy as jnp
from jax.experimental import pallas as pl
from jax.experimental.pallas import tpu as pltpu


def rmsnet_kernel(p_ref, x_ref, o_ref):
    # Carve the packed parameter slab with static slices (single resident VMEM
    # block; per-step cost of these tiny loads is noise at MB-scale tiles).
    w0 = p_ref[0:5, 0:5]        # (5, 5)   Linear(5->5) weight (out, in)
    b0 = p_ref[0:5, 64:65]      # (5, 1)   bias as a column -> broadcasts over lanes
    w1 = p_ref[8:18, 0:5]       # (10, 5)  Linear(5->10)
    b1 = p_ref[8:18, 64:65]     # (10, 1)
    w2 = p_ref[24:25, 0:10]     # (1, 10)  Linear(10->1)
    b2 = p_ref[24:25, 64:65]    # (1, 1)

    x = x_ref[...]              # (5, TB)  batch on lanes

    # Layer 0: ReLU(W0 @ x + b0)    -> (5, TB)
    h = jnp.dot(w0, x, preferred_element_type=jnp.float32) + b0
    h = jnp.maximum(h, 0.0).astype(x.dtype)
    # Layer 1: ReLU(W1 @ h + b1)    -> (10, TB)
    h = jnp.dot(w1, h, preferred_element_type=jnp.float32) + b1
    h = jnp.maximum(h, 0.0).astype(x.dtype)
    # Output: W2 @ h + b2           -> (1, TB), lane-dense store
    out = jnp.dot(w2, h, preferred_element_type=jnp.float32) + b2
    o_ref[...] = out.astype(o_ref.dtype)


def pack_params(params, dtype):
    """Pack all live weights/biases into one (32, 128) slab (weights at col 0, biases at col 64)."""
    w0, b0 = params["input"]     # (5, 5), (5,)
    w1, b1 = params["hidden_1"]  # (10, 5), (10,)
    w2, b2 = params["output"]    # (1, 10), (1,)
    slab = jnp.zeros((32, 128), dtype)
    slab = slab.at[0:5, 0:5].set(w0.astype(dtype))
    slab = slab.at[8:18, 0:5].set(w1.astype(dtype))
    slab = slab.at[24:25, 0:10].set(w2.astype(dtype))
    slab = slab.at[0:5, 64].set(b0.astype(dtype))
    slab = slab.at[8:18, 64].set(b1.astype(dtype))
    slab = slab.at[24:25, 64].set(b2.astype(dtype))
    return slab


def _round_up(n, m):
    return ((n + m - 1) // m) * m


def rmsnet_forward(x, params, *, block_b=None, compute_dtype=None,
                   features_major=False):
    """RMSNet forward.

    x: (B, 5) array — or (5, B) if features_major=True (skips the wrapper
       transpose / extra HBM pass entirely).
    Returns (B, 1) float32, matching the PyTorch module output.
    """
    if features_major:
        B = x.shape[1]
        xt = x                                   # already (5, B)
    else:
        B = x.shape[0]
        xt = x.T                                 # single XLA transpose; no jnp.pad
        # (Pallas masks the ragged last tile; OOB columns are never stored.)

    # bf16 input path at large batch halves HBM traffic and x-tile VMEM;
    # dot accumulation stays f32 inside the kernel.  Small batches stay f32.
    if compute_dtype is None:
        compute_dtype = jnp.bfloat16 if B >= 65536 else jnp.float32
    if xt.dtype != compute_dtype:
        xt = xt.astype(compute_dtype)            # fuses with the transpose

    # Batch tile: MB-scale (amortizes ~0.35 us/step pipeline overhead),
    # multiple of 128 (lane width).  Default ~1 MB of x per tile.
    itemsize = jnp.dtype(compute_dtype).itemsize
    if block_b is None:
        block_b = (1 << 18) // itemsize          # 65536 cols f32 / 131072 cols bf16
    block_b = max(128, (block_b // 128) * 128)   # enforce lane alignment

    tb = min(block_b, _round_up(B, 128))
    # At large B keep >=4 grid steps so v7x's two TensorCores both get work
    # (dimension_semantics="parallel"); never shrink below 8192 columns so
    # per-step overhead stays amortized on single-TC v5e/v6e.
    if B >= 4 * 8192:
        tb = min(tb, max(8192, _round_up(pl.cdiv(B, 4), 128)))
    n_tiles = pl.cdiv(B, tb)

    slab = pack_params(params, compute_dtype)

    out_t = pl.pallas_call(
        rmsnet_kernel,
        out_shape=jax.ShapeDtypeStruct((1, B), jnp.float32),
        grid=(n_tiles,),
        in_specs=[
            # Packed params: constant block index -> fetched once, resident in VMEM.
            pl.BlockSpec((32, 128), lambda i: (0, 0)),
            # x tile: (5, TB) -- full feature dim, TB batch columns per step.
            pl.BlockSpec((5, tb), lambda i: (0, i)),
        ],
        out_specs=pl.BlockSpec((1, tb), lambda i: (0, i)),
        compiler_params=pltpu.CompilerParams(
            dimension_semantics=("parallel",),   # shards tiles across v7x's 2 TCs
            # 32 MiB budget: >= default scoped VMEM on v6e/v7x, raises v5e's 16 MiB;
            # default tile sizes keep 2x in + 2x out buffers + intermediates under it.
            vmem_limit_bytes=32 * 1024 * 1024,
        ),
    )(slab, xt)

    return out_t.T                               # (1, B) -> (B, 1): free reshape


def init_params(key):
    """Deterministic init mirroring the module __init__ shapes (live layers only).
    Weights: Kaiming normal (fan_in, gain sqrt(2)); biases: U(-1/sqrt(fan_in), 1/sqrt(fan_in))."""
    def linear(key, fan_in, fan_out):
        kw, kb = jax.random.split(key)
        std = (2.0 / fan_in) ** 0.5
        w = std * jax.random.normal(kw, (fan_out, fan_in), dtype=jnp.float32)
        bound = 1.0 / (fan_in ** 0.5)
        b = jax.random.uniform(kb, (fan_out,), minval=-bound, maxval=bound,
                               dtype=jnp.float32)
        return w, b

    keys = jax.random.split(key, 3)
    return {
        "input":    linear(keys[0], 5, 5),
        "hidden_1": linear(keys[1], 5, 10),
        "output":   linear(keys[2], 10, 1),
        # hidden_2..hidden_10, batchnorm1d, dropout exist in __init__ but are
        # dead in the forward pass, so they are not materialized here.
    }


def rmsnet_reference(x, params):
    """Pure-JAX reference for correctness check."""
    w0, b0 = params["input"]
    w1, b1 = params["hidden_1"]
    w2, b2 = params["output"]
    h = jnp.maximum(x @ w0.T + b0, 0.0)
    h = jnp.maximum(h @ w1.T + b1, 0.0)
    return h @ w2.T + b2


if __name__ == "__main__":
    key = jax.random.PRNGKey(0)
    k_param, k_x = jax.random.split(key)

    params = init_params(k_param)

    # Small shapes: B=8 (single tile) and B=300 (exercises the ragged-tile
    # masked writeback path now that wrapper padding is gone).  Both use the
    # exact f32 path, so outputs match the reference to tight tolerance.
    for B in (8, 300):
        kx = jax.random.fold_in(k_x, B)
        x = jax.random.normal(kx, (B, 5), dtype=jnp.float32)

        out = jax.block_until_ready(rmsnet_forward(x, params))
        ref = rmsnet_reference(x, params)

        assert out.shape == (B, 1), out.shape
        assert jnp.allclose(out, ref, atol=1e-5, rtol=1e-5), (out, ref)

    print("KERNEL_OK")
</pallas_src>

<mosaic_0001>
module attributes {stable_mosaic.version = 11 : i64} {
  func.func @rmsnet_kernel(%arg0: i32, %arg1: memref<32x128xf32, #tpu.memory_space<vmem>>, %arg2: memref<5x128xf32, #tpu.memory_space<vmem>>, %arg3: memref<1x128xf32, #tpu.memory_space<vmem>>) attributes {dimension_semantics = [#tpu.dimension_semantics<parallel>], iteration_bounds = array<i64: 1>, scalar_prefetch = 0 : i64, scratch_operands = 0 : i64, tpu.core_type = #tpu.core_type<tc>, window_params = [{pipeline_mode = #tpu.pipeline_mode<synchronous>, transform_indices = @transform_0, window_bounds = array<i64: 32, 128>}, {transform_indices = @transform_1, window_bounds = array<i64: 5, 128>}, {transform_indices = @transform_2, window_bounds = array<i64: 1, 128>}]} {
    %c0 = arith.constant 0 : index
    %c0_0 = arith.constant 0 : index
    %0 = vector.load %arg1[%c0, %c0_0] : memref<32x128xf32, #tpu.memory_space<vmem>>, vector<5x5xf32>
    %c0_1 = arith.constant 0 : index
    %c64 = arith.constant 64 : index
    %1 = vector.load %arg1[%c0_1, %c64] : memref<32x128xf32, #tpu.memory_space<vmem>>, vector<5x1xf32>
    %c8 = arith.constant 8 : index
    %c0_2 = arith.constant 0 : index
    %2 = vector.load %arg1[%c8, %c0_2] : memref<32x128xf32, #tpu.memory_space<vmem>>, vector<10x5xf32>
    %c8_3 = arith.constant 8 : index
    %c64_4 = arith.constant 64 : index
    %3 = vector.load %arg1[%c8_3, %c64_4] : memref<32x128xf32, #tpu.memory_space<vmem>>, vector<10x1xf32>
    %c24 = arith.constant 24 : index
    %c0_5 = arith.constant 0 : index
    %4 = vector.load %arg1[%c24, %c0_5] : memref<32x128xf32, #tpu.memory_space<vmem>>, vector<1x10xf32>
    %c24_6 = arith.constant 24 : index
    %c64_7 = arith.constant 64 : index
    %5 = vector.load %arg1[%c24_6, %c64_7] : memref<32x128xf32, #tpu.memory_space<vmem>>, vector<1x1xf32>
    %c0_8 = arith.constant 0 : index
    %c0_9 = arith.constant 0 : index
    %6 = vector.load %arg2[%c0_8, %c0_9] : memref<5x128xf32, #tpu.memory_space<vmem>>, vector<5x128xf32>
    %cst = arith.constant dense<0.000000e+00> : vector<5x128xf32>
    %7 = tpu.matmul %0, %6, %cst {dimension_numbers = #tpu.dot_dimension_numbers<[1], [0], [0], [1], [0, 0, 1, 1], [], []>} : vector<5x5xf32>, vector<5x128xf32>, vector<5x128xf32> -> vector<5x128xf32>
    %8 = vector.broadcast %1 : vector<5x1xf32> to vector<5x128xf32>
    %9 = arith.addf %7, %8 : vector<5x128xf32>
    %cst_10 = arith.constant 0.000000e+00 : f32
    %10 = vector.broadcast %cst_10 : f32 to vector<5x128xf32>
    %11 = arith.maximumf %9, %10 : vector<5x128xf32>
    %cst_11 = arith.constant dense<0.000000e+00> : vector<10x128xf32>
    %12 = tpu.matmul %2, %11, %cst_11 {dimension_numbers = #tpu.dot_dimension_numbers<[1], [0], [0], [1], [0, 0, 1, 1], [], []>} : vector<10x5xf32>, vector<5x128xf32>, vector<10x128xf32> -> vector<10x128xf32>
    %13 = vector.broadcast %3 : vector<10x1xf32> to vector<10x128xf32>
    %14 = arith.addf %12, %13 : vector<10x128xf32>
    %cst_12 = arith.constant 0.000000e+00 : f32
    %15 = vector.broadcast %cst_12 : f32 to vector<10x128xf32>
    %16 = arith.maximumf %14, %15 : vector<10x128xf32>
    %cst_13 = arith.constant dense<0.000000e+00> : vector<1x128xf32>
    %17 = tpu.matmul %4, %16, %cst_13 {dimension_numbers = #tpu.dot_dimension_numbers<[1], [0], [0], [1], [0, 0, 1, 1], [], []>} : vector<1x10xf32>, vector<10x128xf32>, vector<1x128xf32> -> vector<1x128xf32>
    %18 = vector.broadcast %5 : vector<1x1xf32> to vector<1x128xf32>
    %19 = arith.addf %17, %18 : vector<1x128xf32>
    %c0_14 = arith.constant 0 : index
    %c0_15 = arith.constant 0 : index
    %20 = vector.load %arg3[%c0_14, %c0_15] : memref<1x128xf32, #tpu.memory_space<vmem>>, vector<1x128xf32>
    tpu.vector_store %arg3[%c0_14, %c0_15], %19 {strides = array<i32>} : memref<1x128xf32, #tpu.memory_space<vmem>>, vector<1x128xf32>,
    return
  }
  func.func @transform_0(%arg0: i32) -> (i32, i32) {
    %c0_i32 = arith.constant 0 : i32
    %c0_i32_0 = arith.constant 0 : i32
    %c0_i32_1 = arith.constant 0 : i32
    return %c0_i32, %c0_i32_0 : i32, i32
  }
  func.func @transform_1(%arg0: i32) -> (i32, i32) {
    %c0_i32 = arith.constant 0 : i32
    %c0_i32_0 = arith.constant 0 : i32
    return %c0_i32, %arg0 : i32, i32
  }
  func.func @transform_2(%arg0: i32) -> (i32, i32) {
    %c0_i32 = arith.constant 0 : i32
    %c0_i32_0 = arith.constant 0 : i32
    return %c0_i32, %arg0 : i32, i32
  }
}

</mosaic_0001>

<llo_original>
// kernel: tpu_custom_call.1
$region0: #{tpu_custom_call.1}
  #allocation0 [shape = 'u32[]', space=smem, size = 0x4, offset = 0x4, fixed_abs, tag = 'smem constant byte address 0x4 - core index']
  #allocation1 [shape = 'u32[72,128]{1,0:T(1,128)}', space=vmem, size = 0x9000, scoped, tag = 'internal scratch']
  %s0 = inlined_call_operand.hbm [shape: f32[32,128], index: 0, kind: input, shape index: {}]
  %s1 = inlined_call_operand.hbm [shape: f32[5,8], index: 1, kind: input, shape index: {}]
  %s2 = inlined_call_operand.hbm [shape: f32[1,8], index: 2, kind: output, shape index: {}]
  %s3 = sld [smem:[#allocation0]]
  $region26: #{tpu_custom_call.1} parent=0
    _
  %s5 = ssub.s32 1, %s3
  %s6 = scalar_select 0, %s5, %s3
  $region1: #{tpu_custom_call.1} parent=0
    #allocation2 [shape = 'u8[16384]{0}', space=vmem, size = 0x4000, scoped, tag = 'input window, operand 0, single buffered']
    #allocation3 [shape = 's32[1]{0}', space=sflag, size = 0x4, scoped, tag = 'scoped memory for tpu_custom_call.1']
    #allocation4 [shape = 's32[1]{0}', space=sflag, size = 0x4, scoped, tag = 'scoped memory for tpu_custom_call.1']
    #allocation5 [shape = 'u8[4096]{0}', space=vmem, size = 0x1000, scoped, tag = 'input window, operand 1, single buffered']
    #allocation6 [shape = 's32[1]{0}', space=sflag, size = 0x4, scoped, tag = 'scoped memory for tpu_custom_call.1']
    #allocation7 [shape = 'u8[512]{0}', space=vmem, size = 0x400, scoped, tag = 'output window, operand 0, single buffered']
    %7 = vsyncpa [#allocation3], 0
    %8 = vsyncpa [#allocation6], 0
    %9 = vsyncpa [#allocation4], 0
    // Predicated region
    $region2: #{tpu_custom_call.1} parent=1 // pred_check
      _
    $region3: #{tpu_custom_call.1} parent=1 // pred_check_branch
      %11 = sbr.rel (0) target = $region5
    $region4: #{tpu_custom_call.1} parent=1 // pred_region
      %13 = vsyncadd [#allocation3], 0
      %s14 = sshll.u32 %s0, 4
      %s15 = int_to_ptr.hbm [resolvable:$true] %s14
      %s16 = sshll.u32 [#allocation2], 4
      %s17 = int_to_ptr.vmem [resolvable:$true] %s16
      %22 = dma.hbm_to_vmem [thread:$0]  %s15, 512, %s17, [#allocation3], 128, 128, 8
    $region5: #{tpu_custom_call.1} parent=1 // pred_fallthru
      _
    // Predicated region
    $region6: #{tpu_custom_call.1} parent=1 // pred_check
      _
    $region7: #{tpu_custom_call.1} parent=1 // pred_check_branch
      %24 = sbr.rel (0) target = $region9
    $region8: #{tpu_custom_call.1} parent=1 // pred_region
      %26 = vsyncadd [#allocation6], 0
      %s28 = sshll.u32 %s1, 4
      %s29 = int_to_ptr.hbm [resolvable:$true] %s28
      %s30 = sshll.u32 [#allocation5], 4
      %s31 = int_to_ptr.vmem [resolvable:$true] %s30
      %33 = dma.hbm_to_vmem [thread:$0]  %s29, 128, %s31, [#allocation6]
    $region9: #{tpu_custom_call.1} parent=1 // pred_fallthru
      _
    // Predicated region
    $region10: #{tpu_custom_call.1} parent=1 // pred_check
      _
    $region11: #{tpu_custom_call.1} parent=1 // pred_check_branch
      %35 = sbr.rel (0) target = $region13
    $region12: #{tpu_custom_call.1} parent=1 // pred_region
      %37 = dma.done [#allocation3], 512
    $region13: #{tpu_custom_call.1} parent=1 // pred_fallthru
      _
    // Predicated region
    $region14: #{tpu_custom_call.1} parent=1 // pred_check
      _
    $region15: #{tpu_custom_call.1} parent=1 // pred_check_branch
      %39 = sbr.rel (0) target = $region17
    $region16: #{tpu_custom_call.1} parent=1 // pred_region
      %41 = dma.done [#allocation6], 128
    $region17: #{tpu_custom_call.1} parent=1 // pred_fallthru
      _
    %v42 = vld [vmem:[#allocation2] sm:$0x1f]
    %v43 = vld [vmem:[#allocation2 + $0x8] sm:$0xff]
    %v44 = vld [vmem:[#allocation2 + $0x10] sm:$0x3]
    %v45 = vld [vmem:[#allocation2 + $0x18] sm:$0x1]
    %v46 = vld [vmem:[#allocation5] sm:$0x1f]
    %48 = vset.pattern.permute.xlu0 64
    %49 = vperm.xlu0 %48, %v42
    %v50 = vpop.permute.xlu0 %49
    %vm52 = vcmask 39936
    %v53 = vsel %vm52, %v42, 0
    %vm55 = vcmask 1044480
    %v57 = vsel %vm55, %v46, 0
    %59 = vmatpush.msra.mxu0 0.0
    %60 = vmatpush.msra.mxu0 0.0
    %61 = vmatpush.msra.mxu0 0.0
    %62 = vmatpush.msra.mxu0 0.0
    %63 = vmatpush.msra.mxu0 0.0
    %64 = vmatpush.msra.mxu0 0.0
    %65 = vmatpush.msra.mxu0 0.0
    %66 = vmatpush.msra.mxu0 0.0
    %67 = vmatpush.msra.mxu0 0.0
    %68 = vmatpush.msra.mxu0 0.0
    %69 = vmatpush.msra.mxu0 0.0
    %70 = vmatpush.msra.mxu0 0.0
    %71 = vmatpush.msra.mxu0 0.0
    %72 = vmatpush.msra.mxu0 0.0
    %73 = vmatpush.msra.mxu0 0.0
    %74 = vmatpush.msra.mxu0 %v57
    %75 = vmatmul.f32.gmra.mxu0 %v53
    %v76 = vpop.f32.mrf.mxu0
    %v77 = vadd.f32 %v50, %v76
    %78 = vdwg.mxu0
    %v79 = vmax.f32 %v77, 0.0
    %81 = vset.pattern.permute.xlu0 64
    %82 = vperm.xlu0 %81, %v43
    %v83 = vpop.permute.xlu0 %82
    %86 = vset.pattern.permute.xlu0 64
    %87 = vperm.xlu0 %86, %v44
    %v88 = vpop.permute.xlu0 %87
    %v90 = vsel %vm52, %v43, 0
    %v92 = vsel %vm52, %v44, 0
    %v95 = vsel %vm55, %v79, 0
    %97 = vmatpush.msra.mxu0 0.0
    %98 = vmatpush.msra.mxu0 0.0
    %99 = vmatpush.msra.mxu0 0.0
    %100 = vmatpush.msra.mxu0 0.0
    %101 = vmatpush.msra.mxu0 0.0
    %102 = vmatpush.msra.mxu0 0.0
    %103 = vmatpush.msra.mxu0 0.0
    %104 = vmatpush.msra.mxu0 0.0
    %105 = vmatpush.msra.mxu0 0.0
    %106 = vmatpush.msra.mxu0 0.0
    %107 = vmatpush.msra.mxu0 0.0
    %108 = vmatpush.msra.mxu0 0.0
    %109 = vmatpush.msra.mxu0 0.0
    %110 = vmatpush.msra.mxu0 0.0
    %111 = vmatpush.msra.mxu0 0.0
    %112 = vmatpush.msra.mxu0 %v95
    %113 = vmatmul.f32.gmra.mxu0 %v90
    %v114 = vpop.f32.mrf.mxu0
    %v115 = vadd.f32 %v83, %v114
    %116 = vmatmul.f32.gmra.mxu0 %v92
    %v117 = vpop.f32.mrf.mxu0
    %v118 = vadd.f32 %v88, %v117
    %119 = vdwg.mxu0
    %v120 = vmax.f32 %v115, 0.0
    %v121 = vmax.f32 %v118, 0.0
    %123 = vset.pattern.permute.xlu0 64
    %124 = vperm.xlu0 %123, %v45
    %v125 = vpop.permute.xlu0 %124
    %vm127 = vcmask 80896
    %v128 = vsel %vm127, %v45, 0
    %vm130 = vcmask 1041408
    %v132 = vsel %vm130, %v121, 0
    %134 = vmatpush.msra.mxu0 0.0
    %135 = vmatpush.msra.mxu0 0.0
    %136 = vmatpush.msra.mxu0 0.0
    %137 = vmatpush.msra.mxu0 0.0
    %138 = vmatpush.msra.mxu0 0.0
    %139 = vmatpush.msra.mxu0 0.0
    %140 = vmatpush.msra.mxu0 0.0
    %141 = vmatpush.msra.mxu0 0.0
    %142 = vmatpush.msra.mxu0 0.0
    %143 = vmatpush.msra.mxu0 0.0
    %144 = vmatpush.msra.mxu0 0.0
    %145 = vmatpush.msra.mxu0 0.0
    %146 = vmatpush.msra.mxu0 0.0
    %147 = vmatpush.msra.mxu0 0.0
    %148 = vmatpush.msra.mxu0 %v132
    %149 = vmatpush.msra.mxu0 %v120
    %150 = vmatmul.f32.gmra.mxu0 %v128
    %v151 = vpop.f32.mrf.mxu0
    %v152 = vadd.f32 %v125, %v151
    %153 = vdwg.mxu0
    %154 = vst [vmem:[#allocation7] sm:$0x1] %v152
    // Predicated region
    $region18: #{tpu_custom_call.1} parent=1 // pred_check
      _
    $region19: #{tpu_custom_call.1} parent=1 // pred_check_branch
      %156 = sbr.rel (0) target = $region21
    $region20: #{tpu_custom_call.1} parent=1 // pred_region
      %158 = vsyncadd [#allocation4], 0
      %s160 = sshll.u32 [#allocation7], 4
      %s161 = int_to_ptr.vmem [resolvable:$true] %s160
      %s162 = sshll.u32 %s2, 4
      %s163 = int_to_ptr.hbm [resolvable:$true] %s162
      %165 = dma.vmem_to_hbm [thread:$0]  %s161, 16, %s163, [#allocation4]
    $region21: #{tpu_custom_call.1} parent=1 // pred_fallthru
      _
    // Predicated region
    $region22: #{tpu_custom_call.1} parent=1 // pred_check
      _
    $region23: #{tpu_custom_call.1} parent=1 // pred_check_branch
      %167 = sbr.rel (0) target = $region25
    $region24: #{tpu_custom_call.1} parent=1 // pred_region
      %169 = dma.done [#allocation4], 16
    $region25: #{tpu_custom_call.1} parent=1 // pred_fallthru
      _
    %170 = vsyncpa [#allocation3], 1
    %171 = vsyncpa [#allocation6], 1
    %172 = vsyncpa [#allocation4], 1

</llo_original>
